<compile_context>
chip_gen: v6e
topology: v6e:2x2x1
jax: 0.10.0
libtpu: 0.0.40
codegen_flags: <defaults>
</compile_context>

<pallas_src>
import jax
import jax.numpy as jnp
from jax.experimental import pallas as pl
from jax.experimental.pallas import tpu as pltpu

_LANES = 1024      # lane-dense slab width (multiple of 128 -> unmasked vst)
_BLOCK_ROWS = 512  # (512, 1024) f32 = 2 MiB per block


def _swish_kernel(x_ref, o_ref):
    x = x_ref[...]
    # Compute in f32 for torch-parity accuracy (kernel is HBM-bound, so the
    # upcast is hidden under DMA).  sigmoid(x) = 0.5*(1 + tanh(x/2)) is exact
    # and uses a single EUP transcendental; the adds/muls ride the VALU slot.
    # TODO(synk): for bf16 inputs on v6e/v7x, compute natively in bf16 to halve
    # vreg pressure and HBM bytes (v5e has no bf16 VPU/EUP, keep f32 there).
    xf = x.astype(jnp.float32)
    sig = 0.5 + 0.5 * jnp.tanh(0.5 * xf)
    o_ref[...] = (xf * sig).astype(o_ref.dtype)


def _swish_2d(x2d, block_rows):
    """Run the kernel on a lane-dense (rows, _LANES) slab."""
    rows, lanes = x2d.shape

    block_r = min(block_rows, rows)
    # Keep the grid >= 2 steps when there is enough work, so
    # dimension_semantics=("parallel",) can shard rows across both v7x
    # TensorCores instead of serializing one giant block on a single TC.
    # (block_r stays a multiple of 8 after halving; stop at 128 rows so the
    # per-step overhead never dominates.)
    while pl.cdiv(rows, block_r) < 2 and block_r % 16 == 0 and block_r >= 128:
        block_r //= 2

    grid = (pl.cdiv(rows, block_r),)

    return pl.pallas_call(
        _swish_kernel,
        out_shape=jax.ShapeDtypeStruct((rows, lanes), x2d.dtype),
        grid_spec=pltpu.PrefetchScalarGridSpec(
            num_scalar_prefetch=0,
            grid=grid,
            in_specs=[pl.BlockSpec((block_r, lanes), lambda i: (i, 0))],
            out_specs=pl.BlockSpec((block_r, lanes), lambda i: (i, 0)),
        ),
        compiler_params=pltpu.CompilerParams(
            # Independent elementwise row blocks: shard across both TCs on
            # v7x (megacore); no effect on v5e/v6e.
            dimension_semantics=("parallel",),
        ),
    )(x2d)


def swish(x, *, block_rows=_BLOCK_ROWS, lanes=_LANES):
    """Elementwise x * sigmoid(x) (SiLU), matching torch Swish.forward."""
    orig_shape = x.shape
    orig_dtype = x.dtype

    flat = x.reshape(-1)            # free for contiguous arrays (bitcast)
    n = flat.shape[0]

    rows = n // lanes
    bulk_n = rows * lanes

    if bulk_n == 0:
        # Tiny input (< one lane row): fused plain JAX is already optimal.
        xf = flat.astype(jnp.float32)
        return (xf * jax.nn.sigmoid(xf)).astype(orig_dtype).reshape(orig_shape)

    bulk_out = _swish_2d(flat[:bulk_n].reshape(rows, lanes), block_rows)
    bulk_out = bulk_out.reshape(-1)

    if bulk_n == n:
        out_flat = bulk_out
    else:
        # Ragged tail (< lanes elements) in fused plain JAX; avoids the
        # whole-array jnp.pad + [:n] slice round trips through HBM.
        tail = flat[bulk_n:].astype(jnp.float32)
        tail_out = (tail * jax.nn.sigmoid(tail)).astype(orig_dtype)
        out_flat = jnp.concatenate([bulk_out, tail_out])

    return out_flat.reshape(orig_shape)


if __name__ == "__main__":
    key = jax.random.PRNGKey(0)
    # NCHW input, same convention as the PyTorch module would receive.
    x = jax.random.normal(key, (2, 4, 16, 16), dtype=jnp.float32)

    y = swish(x)
    jax.block_until_ready(y)

    # Correctness check against plain-JAX reference (exact sigmoid).  The
    # tanh formulation agrees to a few ulps, so a tight tolerance is used.
    y_ref = x * jax.nn.sigmoid(x)
    assert y.shape == x.shape and y.dtype == x.dtype
    err = float(jnp.max(jnp.abs(y - y_ref)))
    assert err < 1e-5, f"max abs error {err}"

    print("KERNEL_OK")
</pallas_src>

<mosaic_0001>
module attributes {stable_mosaic.version = 11 : i64} {
  func.func @_swish_kernel(%arg0: i32, %arg1: memref<2x1024xf32, #tpu.memory_space<vmem>>, %arg2: memref<2x1024xf32, #tpu.memory_space<vmem>>) attributes {dimension_semantics = [#tpu.dimension_semantics<parallel>], iteration_bounds = array<i64: 1>, scalar_prefetch = 0 : i64, scratch_operands = 0 : i64, tpu.core_type = #tpu.core_type<tc>, window_params = [{transform_indices = @transform_0, window_bounds = array<i64: 2, 1024>}, {transform_indices = @transform_1, window_bounds = array<i64: 2, 1024>}]} {
    %c0 = arith.constant 0 : index
    %c0_0 = arith.constant 0 : index
    %0 = vector.load %arg1[%c0, %c0_0] : memref<2x1024xf32, #tpu.memory_space<vmem>>, vector<2x1024xf32>
    %cst = arith.constant 5.000000e-01 : f32
    %1 = vector.broadcast %cst : f32 to vector<2x1024xf32>
    %2 = arith.mulf %1, %0 : vector<2x1024xf32>
    %3 = math.tanh %2 : vector<2x1024xf32>
    %cst_1 = arith.constant 5.000000e-01 : f32
    %4 = vector.broadcast %cst_1 : f32 to vector<2x1024xf32>
    %5 = arith.mulf %4, %3 : vector<2x1024xf32>
    %cst_2 = arith.constant 5.000000e-01 : f32
    %6 = vector.broadcast %cst_2 : f32 to vector<2x1024xf32>
    %7 = arith.addf %6, %5 : vector<2x1024xf32>
    %8 = arith.mulf %0, %7 : vector<2x1024xf32>
    %c0_3 = arith.constant 0 : index
    %c0_4 = arith.constant 0 : index
    %9 = vector.load %arg2[%c0_3, %c0_4] : memref<2x1024xf32, #tpu.memory_space<vmem>>, vector<2x1024xf32>
    tpu.vector_store %arg2[%c0_3, %c0_4], %8 {strides = array<i32>} : memref<2x1024xf32, #tpu.memory_space<vmem>>, vector<2x1024xf32>,
    return
  }
  func.func @transform_0(%arg0: i32) -> (i32, i32) {
    %c0_i32 = arith.constant 0 : i32
    %c0_i32_0 = arith.constant 0 : i32
    return %arg0, %c0_i32 : i32, i32
  }
  func.func @transform_1(%arg0: i32) -> (i32, i32) {
    %c0_i32 = arith.constant 0 : i32
    %c0_i32_0 = arith.constant 0 : i32
    return %arg0, %c0_i32 : i32, i32
  }
}

</mosaic_0001>

<llo_original>
// kernel: tpu_custom_call.1
$region0: #{tpu_custom_call.1}
  #allocation0 [shape = 'u32[]', space=smem, size = 0x4, offset = 0x4, fixed_abs, tag = 'smem constant byte address 0x4 - core index']
  #allocation1 [shape = 'u32[144,128]{1,0:T(1,128)}', space=vmem, size = 0x12000, scoped, tag = 'internal scratch']
  %s0 = inlined_call_operand.hbm [shape: f32[2,1024], index: 0, kind: input, shape index: {}]
  %s1 = inlined_call_operand.hbm [shape: f32[2,1024], index: 1, kind: output, shape index: {}]
  %s2 = sld [smem:[#allocation0]]
  $region18: #{tpu_custom_call.1} parent=0
    _
  %s4 = ssub.s32 1, %s2
  %s5 = scalar_select 0, %s4, %s2
  $region1: #{tpu_custom_call.1} parent=0
    #allocation2 [shape = 'u8[8192]{0}', space=vmem, size = 0x2000, scoped, tag = 'input window, operand 0, single buffered']
    #allocation3 [shape = 's32[1]{0}', space=sflag, size = 0x4, scoped, tag = 'scoped memory for tpu_custom_call.1']
    #allocation4 [shape = 's32[1]{0}', space=sflag, size = 0x4, scoped, tag = 'scoped memory for tpu_custom_call.1']
    #allocation5 [shape = 'u8[8192]{0}', space=vmem, size = 0x2000, scoped, tag = 'output window, operand 0, single buffered']
    %6 = vsyncpa [#allocation3], 0
    %7 = vsyncpa [#allocation4], 0
    // Predicated region
    $region2: #{tpu_custom_call.1} parent=1 // pred_check
      _
    $region3: #{tpu_custom_call.1} parent=1 // pred_check_branch
      %9 = sbr.rel (0) target = $region5
    $region4: #{tpu_custom_call.1} parent=1 // pred_region
      %s11 = ssub.s32 256, 256
      %12 = vsyncadd [#allocation3], %s11
      %s14 = sshll.u32 [#allocation2], 4
      %s15 = int_to_ptr.vmem [resolvable:$true] %s14
      %17 = dma.hbm_to_vmem [thread:$0]  %s0, 256, %s15, [#allocation3]
    $region5: #{tpu_custom_call.1} parent=1 // pred_fallthru
      _
    // Predicated region
    $region6: #{tpu_custom_call.1} parent=1 // pred_check
      _
    $region7: #{tpu_custom_call.1} parent=1 // pred_check_branch
      %19 = sbr.rel (0) target = $region9
    $region8: #{tpu_custom_call.1} parent=1 // pred_region
      %20 = dma.done [#allocation3], 256
    $region9: #{tpu_custom_call.1} parent=1 // pred_fallthru
      _
    %v21 = vld [vmem:[#allocation2] sm:$0xff]
    %v22 = vld [vmem:[#allocation2 + $0x8] sm:$0xff]
    %v23 = vmul.f32 %v21, 0.5
    %v24 = vmul.f32 %v22, 0.5
    %v25 = vtanh.pop %v23
    %v26 = vtanh.pop %v24
    %v27 = vmul.f32 %v25, 0.5
    %v28 = vmul.f32 %v26, 0.5
    %v29 = vadd.f32 %v27, 0.5
    %v30 = vadd.f32 %v28, 0.5
    %v31 = vmul.f32 %v21, %v29
    %v32 = vmul.f32 %v22, %v30
    %33 = vst [vmem:[#allocation5] sm:$0xff] %v31
    %34 = vst [vmem:[#allocation5 + $0x8] sm:$0xff] %v32
    // Predicated region
    $region10: #{tpu_custom_call.1} parent=1 // pred_check
      _
    $region11: #{tpu_custom_call.1} parent=1 // pred_check_branch
      %36 = sbr.rel (0) target = $region13
    $region12: #{tpu_custom_call.1} parent=1 // pred_region
      %s38 = ssub.s32 256, 256
      %39 = vsyncadd [#allocation4], %s38
      %s41 = sshll.u32 [#allocation5], 4
      %s42 = int_to_ptr.vmem [resolvable:$true] %s41
      %44 = dma.vmem_to_hbm [thread:$0]  %s42, 256, %s1, [#allocation4]
    $region13: #{tpu_custom_call.1} parent=1 // pred_fallthru
      _
    // Predicated region
    $region14: #{tpu_custom_call.1} parent=1 // pred_check
      _
    $region15: #{tpu_custom_call.1} parent=1 // pred_check_branch
      %46 = sbr.rel (0) target = $region17
    $region16: #{tpu_custom_call.1} parent=1 // pred_region
      %47 = dma.done [#allocation4], 256
    $region17: #{tpu_custom_call.1} parent=1 // pred_fallthru
      _
    %48 = vsyncpa [#allocation3], 1
    %49 = vsyncpa [#allocation4], 1

</llo_original>
